<compile_context>
chip_gen: v6e
topology: v6e:2x2x1
jax: 0.10.0
libtpu: 0.0.40
codegen_flags: <defaults>
</compile_context>

<pallas_src>
import math
from functools import partial

import jax
import jax.numpy as jnp
from jax.experimental import pallas as pl
from jax.experimental.pallas import tpu as pltpu

MIN_EXPERT_CAPACITY = 4
EPS = 1e-9
LOSS_COEF = 0.01


# ----------------------------------------------------------------------------
# helpers
# ----------------------------------------------------------------------------
def _round_up(x, m):
    return ((x + m - 1) // m) * m


def _pick_tile(total, max_tile, align):
    """Return (tile, padded_total): tile % align == 0 and tile divides padded_total."""
    total_a = _round_up(max(total, align), align)
    if total_a <= max_tile:
        return total_a, total_a
    for t in range(max_tile - (max_tile % align), 0, -align):
        if total_a % t == 0:
            return t, total_a
    return max_tile, _round_up(total_a, max_tile)


def _pad_to(x, shape):
    pads = [(0, s - d) for s, d in zip(shape, x.shape)]
    if all(p == (0, 0) for p in pads):
        return x
    return jnp.pad(x, pads)


# ----------------------------------------------------------------------------
# Pallas kernels: per-expert feed-forward  out = relu(x @ w1) @ w2
# ----------------------------------------------------------------------------
def _expert_ffn_kernel_single(counts_ref, x_ref, w1_ref, w2_ref, o_ref):
    """Fast path: whole hidden dim in one tile.  grid = (E, token_tiles)."""
    e = pl.program_id(0)
    count = counts_ref[e]                       # routed-token count (SMEM scalar)

    @pl.when(count > 0)
    def _compute():
        hid = jnp.dot(x_ref[...], w1_ref[...],
                      preferred_element_type=jnp.float32)       # (TN, H) f32
        hid = jnp.maximum(hid, 0.0).astype(w2_ref.dtype)        # ReLU -> bf16
        o_ref[...] = jnp.dot(hid, w2_ref[...],
                             preferred_element_type=jnp.float32
                             ).astype(o_ref.dtype)              # (TN, d)

    @pl.when(count == 0)
    def _zero():
        o_ref[...] = jnp.zeros_like(o_ref)


def _expert_ffn_kernel_acc(counts_ref, x_ref, w1_ref, w2_ref, o_ref, acc_ref):
    """General path: hidden dim tiled (reduction axis last).
    grid = (E, token_tiles, hidden_tiles)."""
    e = pl.program_id(0)
    h = pl.program_id(2)
    n_h = pl.num_programs(2)
    count = counts_ref[e]

    @pl.when(h == 0)
    def _init():
        acc_ref[...] = jnp.zeros_like(acc_ref)

    # Skip the MXU work entirely for experts with no routed tokens.
    @pl.when(count > 0)
    def _compute():
        hid = jnp.dot(x_ref[...], w1_ref[...],
                      preferred_element_type=jnp.float32)       # (TN, TH) f32
        hid = jnp.maximum(hid, 0.0).astype(w2_ref.dtype)        # ReLU -> bf16
        acc_ref[...] += jnp.dot(hid, w2_ref[...],
                                preferred_element_type=jnp.float32)  # (TN, d)

    @pl.when(h == n_h - 1)
    def _finalize():
        o_ref[...] = acc_ref[...].astype(o_ref.dtype)


def experts_ffn(x, w1, w2, counts, *, max_tn=256, max_th=1024):
    """x: (E, N, d), w1: (E, d, H), w2: (E, H, d), counts: (E,) int32 -> (E, N, d) f32.

    Tiles: token tile TN (multiple of 16), hidden tile TH and dim d padded to
    multiples of 128 (lane-dense, MXU-aligned).  bf16 operands, f32 accumulate.
    """
    E, N, d = x.shape
    H = w1.shape[-1]

    TN, N_pad = _pick_tile(N, max_tn, 16)       # v5e users may prefer max_tn=128
    TH, H_pad = _pick_tile(H, max_th, 128)
    d_pad = _round_up(d, 128)

    xb = _pad_to(x, (E, N_pad, d_pad)).astype(jnp.bfloat16)
    w1b = _pad_to(w1, (E, d_pad, H_pad)).astype(jnp.bfloat16)
    w2b = _pad_to(w2, (E, H_pad, d_pad)).astype(jnp.bfloat16)

    single_h = (H_pad == TH)

    # double-buffered blocks (+ f32 accumulator on the general path); raise
    # scoped VMEM if needed, with headroom below v7x's 64 MiB physical VMEM.
    block_bytes = 2 * (TN * d_pad * 2 + d_pad * TH * 2 + TH * d_pad * 2
                       + TN * d_pad * 4)
    if not single_h:
        block_bytes += TN * d_pad * 4
    vmem_limit = int(min(56 * 2**20, max(32 * 2**20, 2 * block_bytes)))

    out_shape = jax.ShapeDtypeStruct((E, N_pad, d_pad), jnp.float32)

    if single_h:
        grid = (E, N_pad // TN)
        grid_spec = pltpu.PrefetchScalarGridSpec(
            num_scalar_prefetch=1,
            grid=grid,
            in_specs=[
                pl.BlockSpec((pl.Squeezed(), TN, d_pad),
                             lambda e, t, cnt: (e, t, 0)),
                pl.BlockSpec((pl.Squeezed(), d_pad, TH),
                             lambda e, t, cnt: (e, 0, 0)),
                pl.BlockSpec((pl.Squeezed(), TH, d_pad),
                             lambda e, t, cnt: (e, 0, 0)),
            ],
            out_specs=pl.BlockSpec((pl.Squeezed(), TN, d_pad),
                                   lambda e, t, cnt: (e, t, 0)),
        )
        kernel = _expert_ffn_kernel_single
        dim_sem = ("parallel", "parallel")
    else:
        grid = (E, N_pad // TN, H_pad // TH)
        grid_spec = pltpu.PrefetchScalarGridSpec(
            num_scalar_prefetch=1,
            grid=grid,
            in_specs=[
                pl.BlockSpec((pl.Squeezed(), TN, d_pad),
                             lambda e, t, h, cnt: (e, t, 0)),
                pl.BlockSpec((pl.Squeezed(), d_pad, TH),
                             lambda e, t, h, cnt: (e, 0, h)),
                pl.BlockSpec((pl.Squeezed(), TH, d_pad),
                             lambda e, t, h, cnt: (e, h, 0)),
            ],
            out_specs=pl.BlockSpec((pl.Squeezed(), TN, d_pad),
                                   lambda e, t, h, cnt: (e, t, 0)),
            scratch_shapes=[pltpu.VMEM((TN, d_pad), jnp.float32)],
        )
        kernel = _expert_ffn_kernel_acc
        dim_sem = ("parallel", "parallel", "arbitrary")

    out = pl.pallas_call(
        kernel,
        out_shape=out_shape,
        grid_spec=grid_spec,
        compiler_params=pltpu.CompilerParams(
            dimension_semantics=dim_sem,
            vmem_limit_bytes=vmem_limit,
        ),
    )(counts.astype(jnp.int32), xb, w1b, w2b)

    # TODO(synk): empty-expert skip avoids MXU work but weight DMA still runs;
    # a manual (pl.ANY + make_async_copy) pipeline could skip the DMA too.
    return out[:, :N, :d]


# ----------------------------------------------------------------------------
# Top2Gating (pure JAX glue — small, data-dependent bookkeeping)
# ----------------------------------------------------------------------------
def _cumsum_exclusive(t, axis=-2):
    return jnp.cumsum(t, axis=axis) - t


def top2_gating(x, w_gating, key, *, policy="random", threshold=0.2,
                capacity_factor=1.25, importance=None):
    """x: (..., b, n, d); w_gating: (..., d, e)."""
    group_size = x.shape[-2]
    num_gates = w_gating.shape[-1]
    dt = x.dtype

    raw_gates = jnp.einsum("...bnd,...de->...bne", x, w_gating)
    raw_gates = jax.nn.softmax(raw_gates, axis=-1)

    # top-1
    index_1 = jnp.argmax(raw_gates, axis=-1)
    gate_1 = jnp.max(raw_gates, axis=-1)
    mask_1 = jax.nn.one_hot(index_1, num_gates, dtype=dt)
    density_1_proxy = raw_gates

    if importance is not None:
        eq1 = (importance == 1.0).astype(dt)
        mask_1 = mask_1 * eq1[..., None]
        gate_1 = gate_1 * eq1
        density_1_proxy = density_1_proxy * eq1[..., None]

    gates_without_top_1 = raw_gates * (1.0 - mask_1)
    index_2 = jnp.argmax(gates_without_top_1, axis=-1)
    gate_2 = jnp.max(gates_without_top_1, axis=-1)
    mask_2 = jax.nn.one_hot(index_2, num_gates, dtype=dt)

    if importance is not None:
        gt0 = (importance > 0.0).astype(dt)
        mask_2 = mask_2 * gt0[..., None]

    denom = gate_1 + gate_2 + EPS
    gate_1 = gate_1 / denom
    gate_2 = gate_2 / denom

    # balancing loss
    density_1 = jnp.mean(mask_1, axis=-2)
    density_1_proxy_m = jnp.mean(density_1_proxy, axis=-2)
    loss = jnp.mean(density_1_proxy_m * density_1) * float(num_gates ** 2)

    # second-expert policy (module default: 'random')
    if policy == "all":
        pass
    elif policy == "none":
        mask_2 = jnp.zeros_like(mask_2)
    elif policy == "threshold":
        mask_2 = mask_2 * (gate_2 > threshold).astype(dt)[..., None]
    elif policy == "random":
        probs = jax.random.uniform(key, gate_2.shape, dtype=dt)
        mask_2 = mask_2 * (
            probs < (gate_2 / max(threshold, EPS))).astype(dt)[..., None]
    else:
        raise ValueError(f"unknown policy {policy}")

    expert_capacity = min(group_size,
                          int((group_size * capacity_factor) / num_gates))
    expert_capacity = max(expert_capacity, MIN_EXPERT_CAPACITY)
    expert_capacity_f = float(expert_capacity)

    # assignment to experts (position within expert mini-batch)
    position_in_expert_1 = _cumsum_exclusive(mask_1, axis=-2) * mask_1
    mask_1 = mask_1 * (position_in_expert_1 < expert_capacity_f).astype(dt)
    mask_1_count = jnp.sum(mask_1, axis=-2, keepdims=True)
    mask_1_flat = jnp.sum(mask_1, axis=-1)
    position_in_expert_1 = jnp.sum(position_in_expert_1, axis=-1)
    gate_1 = gate_1 * mask_1_flat

    position_in_expert_2 = _cumsum_exclusive(mask_2, axis=-2) + mask_1_count
    position_in_expert_2 = position_in_expert_2 * mask_2
    mask_2 = mask_2 * (position_in_expert_2 < expert_capacity_f).astype(dt)
    mask_2_flat = jnp.sum(mask_2, axis=-1)
    position_in_expert_2 = jnp.sum(position_in_expert_2, axis=-1)
    gate_2 = gate_2 * mask_2_flat

    combine_tensor = (
        gate_1[..., None, None]
        * mask_1_flat[..., None, None]
        * jax.nn.one_hot(index_1, num_gates, dtype=dt)[..., None]
        * jax.nn.one_hot(position_in_expert_1.astype(jnp.int32),
                         expert_capacity, dtype=dt)[..., None, :]
        + gate_2[..., None, None]
        * mask_2_flat[..., None, None]
        * jax.nn.one_hot(index_2, num_gates, dtype=dt)[..., None]
        * jax.nn.one_hot(position_in_expert_2.astype(jnp.int32),
                         expert_capacity, dtype=dt)[..., None, :]
    )
    dispatch_tensor = (combine_tensor != 0).astype(dt)
    return dispatch_tensor, combine_tensor, loss


# ----------------------------------------------------------------------------
# HierarchicalMoE forward (training-mode defaults: policy='random',
# threshold=0.2, capacity_factor=1.25)
# ----------------------------------------------------------------------------
def init_hierarchical_moe(key, dim, num_experts=(4, 4), hidden_dim=None):
    eo, ei = num_experts
    hidden_dim = hidden_dim if hidden_dim is not None else dim * 4
    k1, k2, k3, k4 = jax.random.split(key, 4)
    std1 = 1.0 / math.sqrt(hidden_dim)   # init_(w1): uniform(+-1/sqrt(last dim))
    std2 = 1.0 / math.sqrt(dim)
    params = {
        "eo": eo,
        "ei": ei,
        "w_gate_outer": jax.random.normal(k1, (dim, eo), jnp.float32),
        "w_gate_inner": jax.random.normal(k2, (eo, dim, ei), jnp.float32),
        "w1": jax.random.uniform(k3, (eo, ei, dim, hidden_dim), jnp.float32,
                                 minval=-std1, maxval=std1),
        "w2": jax.random.uniform(k4, (eo, ei, hidden_dim, dim), jnp.float32,
                                 minval=-std2, maxval=std2),
    }
    return params


@partial(jax.jit, static_argnames=("eo", "ei"))
def _forward(params, inputs, key, eo, ei):
    b, n, d = inputs.shape
    k_outer, k_inner = jax.random.split(key)

    # outer gating
    dispatch_outer, combine_outer, loss_outer = top2_gating(
        inputs, params["w_gate_outer"], k_outer)

    # dispatch tokens to outer experts
    # TODO(synk): these dense one-hot dispatch/combine einsums stay in XLA; at
    # production sizes they should become a scalar-prefetched gather/scatter
    # Pallas path (pl.Element index_map on token->slot indices).
    expert_inputs_outer = jnp.einsum("bnd,bnec->ebcd", inputs, dispatch_outer)

    # importance for inner gating
    importance = jnp.transpose(combine_outer, (2, 0, 3, 1)).sum(axis=-1)
    importance = 0.5 * ((importance > 0.5).astype(inputs.dtype)
                        + (importance > 0.0).astype(inputs.dtype))

    # inner gating
    dispatch_inner, combine_inner, loss_inner = top2_gating(
        expert_inputs_outer, params["w_gate_inner"], k_inner,
        importance=importance)

    # dispatch to inner experts
    expert_inputs = jnp.einsum("ebnd,ebnfc->efbcd",
                               expert_inputs_outer, dispatch_inner)
    orig_shape = expert_inputs.shape                     # (eo, ei, b, c_in, d)

    # per-(outer,inner)-expert routed-token counts -> skip empty experts
    counts = jnp.sum(dispatch_inner, axis=(1, 2, 4)).reshape(eo * ei)
    counts = counts.astype(jnp.int32)

    # -------- expert FFN hot path: Pallas kernel (bf16 MXU, f32 acc) --------
    x_flat = expert_inputs.reshape(eo * ei, -1, d)
    w1_flat = params["w1"].reshape(eo * ei, d, -1)
    w2_flat = params["w2"].reshape(eo * ei, -1, d)
    expert_outputs = experts_ffn(x_flat, w1_flat, w2_flat, counts)
    expert_outputs = expert_outputs.reshape(orig_shape)
    # -------------------------------------------------------------------------

    # combine back
    expert_outputs_outer = jnp.einsum("efbcd,ebnfc->ebnd",
                                      expert_outputs, combine_inner)
    output = jnp.einsum("ebcd,bnec->bnd", expert_outputs_outer, combine_outer)
    return output, (loss_outer + loss_inner) * LOSS_COEF


def hierarchical_moe_forward(params, inputs, key):
    return _forward(params, inputs, key, params["eo"], params["ei"])


# ----------------------------------------------------------------------------
if __name__ == "__main__":
    key = jax.random.PRNGKey(0)
    k_param, k_input, k_gate = jax.random.split(key, 3)

    b, n, d = 2, 8, 32
    num_experts = (4, 4)

    params = init_hierarchical_moe(k_param, dim=d, num_experts=num_experts)
    inputs = jax.random.normal(k_input, (b, n, d), jnp.float32)

    # TODO(synk): the 'random' second-expert policy is inherently stochastic in
    # the reference; here it uses a fixed JAX PRNG key for determinism.
    output, aux_loss = hierarchical_moe_forward(params, inputs, k_gate)
    output = jax.block_until_ready(output)
    aux_loss = jax.block_until_ready(aux_loss)

    assert output.shape == (b, n, d), output.shape
    assert output.dtype == jnp.float32
    assert bool(jnp.all(jnp.isfinite(output)))
    assert bool(jnp.isfinite(aux_loss))

    print("KERNEL_OK")
</pallas_src>

<mosaic_0001>
module attributes {stable_mosaic.version = 11 : i64} {
  func.func @_expert_ffn_kernel_single(%arg0: i32, %arg1: i32, %arg2: memref<16xi32, #tpu.memory_space<smem>>, %arg3: memref<1x16x128xbf16, #tpu.memory_space<vmem>>, %arg4: memref<1x128x128xbf16, #tpu.memory_space<vmem>>, %arg5: memref<1x128x128xbf16, #tpu.memory_space<vmem>>, %arg6: memref<1x16x128xf32, #tpu.memory_space<vmem>>) attributes {dimension_semantics = [#tpu.dimension_semantics<parallel>, #tpu.dimension_semantics<parallel>], iteration_bounds = array<i64: 16, 1>, scalar_prefetch = 1 : i64, scratch_operands = 0 : i64, tpu.core_type = #tpu.core_type<tc>, window_params = [{transform_indices = @transform_0, window_bounds = array<i64: 1, 16, 128>}, {transform_indices = @transform_1, window_bounds = array<i64: 1, 128, 128>}, {transform_indices = @transform_2, window_bounds = array<i64: 1, 128, 128>}, {transform_indices = @transform_3, window_bounds = array<i64: 1, 16, 128>}]} {
    %0 = arith.index_cast %arg0 : i32 to index
    %1 = memref.load %arg2[%0] : memref<16xi32, #tpu.memory_space<smem>>
    %c0_i32 = arith.constant 0 : i32
    %2 = arith.cmpi sgt, %1, %c0_i32 : i32
    %3 = arith.extui %2 : i1 to i32
    %c0_i32_0 = arith.constant 0 : i32
    %4 = arith.cmpi ne, %3, %c0_i32_0 : i32
    scf.if %4 {
      %c0 = arith.constant 0 : index
      %c0_3 = arith.constant 0 : index
      %c0_4 = arith.constant 0 : index
      %8 = vector.load %arg3[%c0, %c0_3, %c0_4] : memref<1x16x128xbf16, #tpu.memory_space<vmem>>, vector<1x16x128xbf16>
      %9 = vector.shape_cast %8 : vector<1x16x128xbf16> to vector<16x128xbf16>
      %c0_5 = arith.constant 0 : index
      %c0_6 = arith.constant 0 : index
      %c0_7 = arith.constant 0 : index
      %10 = vector.load %arg4[%c0_5, %c0_6, %c0_7] : memref<1x128x128xbf16, #tpu.memory_space<vmem>>, vector<1x128x128xbf16>
      %11 = vector.shape_cast %10 : vector<1x128x128xbf16> to vector<128x128xbf16>
      %cst = arith.constant dense<0.000000e+00> : vector<16x128xf32>
      %12 = tpu.matmul %9, %11, %cst {dimension_numbers = #tpu.dot_dimension_numbers<[1], [0], [0], [1], [0, 0, 1, 1], [], []>} : vector<16x128xbf16>, vector<128x128xbf16>, vector<16x128xf32> -> vector<16x128xf32>
      %cst_8 = arith.constant 0.000000e+00 : f32
      %13 = vector.broadcast %cst_8 : f32 to vector<16x128xf32>
      %14 = arith.maximumf %12, %13 : vector<16x128xf32>
      %15 = arith.truncf %14 : vector<16x128xf32> to vector<16x128xbf16>
      %c0_9 = arith.constant 0 : index
      %c0_10 = arith.constant 0 : index
      %c0_11 = arith.constant 0 : index
      %16 = vector.load %arg5[%c0_9, %c0_10, %c0_11] : memref<1x128x128xbf16, #tpu.memory_space<vmem>>, vector<1x128x128xbf16>
      %17 = vector.shape_cast %16 : vector<1x128x128xbf16> to vector<128x128xbf16>
      %cst_12 = arith.constant dense<0.000000e+00> : vector<16x128xf32>
      %18 = tpu.matmul %15, %17, %cst_12 {dimension_numbers = #tpu.dot_dimension_numbers<[1], [0], [0], [1], [0, 0, 1, 1], [], []>} : vector<16x128xbf16>, vector<128x128xbf16>, vector<16x128xf32> -> vector<16x128xf32>
      %c0_13 = arith.constant 0 : index
      %c0_14 = arith.constant 0 : index
      %c0_15 = arith.constant 0 : index
      %19 = vector.load %arg6[%c0_13, %c0_14, %c0_15] : memref<1x16x128xf32, #tpu.memory_space<vmem>>, vector<1x16x128xf32>
      %20 = vector.shape_cast %19 : vector<1x16x128xf32> to vector<16x128xf32>
      %21 = vector.shape_cast %18 : vector<16x128xf32> to vector<1x16x128xf32>
      tpu.vector_store %arg6[%c0_13, %c0_14, %c0_15], %21 {strides = array<i32>} : memref<1x16x128xf32, #tpu.memory_space<vmem>>, vector<1x16x128xf32>,
    } else {
    }
    %c0_i32_1 = arith.constant 0 : i32
    %5 = arith.cmpi eq, %1, %c0_i32_1 : i32
    %6 = arith.extui %5 : i1 to i32
    %c0_i32_2 = arith.constant 0 : i32
    %7 = arith.cmpi ne, %6, %c0_i32_2 : i32
    scf.if %7 {
      %cst = arith.constant 0.000000e+00 : f32
      %8 = vector.broadcast %cst : f32 to vector<16x128xf32>
      %c0 = arith.constant 0 : index
      %c0_3 = arith.constant 0 : index
      %c0_4 = arith.constant 0 : index
      %9 = vector.load %arg6[%c0, %c0_3, %c0_4] : memref<1x16x128xf32, #tpu.memory_space<vmem>>, vector<1x16x128xf32>
      %10 = vector.shape_cast %9 : vector<1x16x128xf32> to vector<16x128xf32>
      %11 = vector.shape_cast %8 : vector<16x128xf32> to vector<1x16x128xf32>
      tpu.vector_store %arg6[%c0, %c0_3, %c0_4], %11 {strides = array<i32>} : memref<1x16x128xf32, #tpu.memory_space<vmem>>, vector<1x16x128xf32>,
    } else {
    }
    return
  }
  func.func @transform_0(%arg0: i32, %arg1: i32, %arg2: memref<16xi32, #tpu.memory_space<smem>>) -> (i32, i32, i32) {
    %c0_i32 = arith.constant 0 : i32
    %c0_i32_0 = arith.constant 0 : i32
    return %arg0, %arg1, %c0_i32 : i32, i32, i32
  }
  func.func @transform_1(%arg0: i32, %arg1: i32, %arg2: memref<16xi32, #tpu.memory_space<smem>>) -> (i32, i32, i32) {
    %c0_i32 = arith.constant 0 : i32
    %c0_i32_0 = arith.constant 0 : i32
    %c0_i32_1 = arith.constant 0 : i32
    return %arg0, %c0_i32, %c0_i32_0 : i32, i32, i32
  }
  func.func @transform_2(%arg0: i32, %arg1: i32, %arg2: memref<16xi32, #tpu.memory_space<smem>>) -> (i32, i32, i32) {
    %c0_i32 = arith.constant 0 : i32
    %c0_i32_0 = arith.constant 0 : i32
    %c0_i32_1 = arith.constant 0 : i32
    return %arg0, %c0_i32, %c0_i32_0 : i32, i32, i32
  }
  func.func @transform_3(%arg0: i32, %arg1: i32, %arg2: memref<16xi32, #tpu.memory_space<smem>>) -> (i32, i32, i32) {
    %c0_i32 = arith.constant 0 : i32
    %c0_i32_0 = arith.constant 0 : i32
    return %arg0, %arg1, %c0_i32 : i32, i32, i32
  }
}

</mosaic_0001>

<llo_original>
// kernel: _forward.3
$region0: #{_forward.3}
  #allocation0 [shape = 'u32[]', space=smem, size = 0x4, offset = 0x4, fixed_abs, tag = 'smem constant byte address 0x4 - core index']
  #allocation1 [shape = 'u32[144,128]{1,0:T(1,128)}', space=vmem, size = 0x12000, scoped, tag = 'internal scratch']
  #allocation2 [shape = 's32[1]{0}', space=sflag, size = 0x4, scoped, tag = 'scoped memory for _forward.3']
  #allocation3 [shape = 'u8[512]{0}', space=smem, size = 0x200, scoped, tag = 'prefetched SMEM operand 0']
  %s0 = inlined_call_operand.vmem [shape: s32[16], index: 0, kind: input, shape index: {}]
  %s1 = inlined_call_operand.vmem [shape: bf16[16,16,128], index: 1, kind: input, shape index: {}]
  %s2 = inlined_call_operand.vmem [shape: bf16[16,128,128], index: 2, kind: input, shape index: {}]
  %s3 = inlined_call_operand.vmem [shape: bf16[16,128,128], index: 3, kind: input, shape index: {}]
  %s4 = inlined_call_operand.vmem [shape: f32[16,16,128], index: 4, kind: output, shape index: {}]
  %s5 = sld [smem:[#allocation0]]
  $region53: #{_forward.3} parent=0
    _
  %s7 = ssub.s32 1, %s5
  %s8 = scalar_select 0, %s7, %s5
  %s9 = sshll.u32 %s0, 4
  %s10 = int_to_ptr.vmem [resolvable:$true] %s9
  %12 = dma.vmem_to_smem %s10, 16, [#allocation3], [#allocation2]
  %13 = dma.done [#allocation2], 16
  %14 = sfence
  loop: start=0, step=1, limit=18
  $region2: #{_forward.3} parent=0 // loop_pre_header
    _
  $region3: #{_forward.3} parent=0 // loop_header
    %s16 = sphi 0, %s20
    %p17 = scmp.ge.s32.totalorder %s16, 18
    %s23 = sphi 0, %s35
    %s24 = sphi 0, %s31
    %s25 = sphi 0, %s23
    %s26 = sphi 0, %s24
    %s27 = sphi 0, %s25
    %s28 = sphi 0, %s26
    %s40 = sphi 0, %s42
    %s43 = sphi 0, %s40
    %s44 = sphi 0, %s43
    %s60 = sphi 0, %s44
    %s66 = sphi 0, %s68
    %s69 = sphi 0, %s66
    %s70 = sphi 0, %s69
    %s86 = sphi 0, %s70
    %s92 = sphi 0, %s94
    %s95 = sphi 0, %s92
    %s96 = sphi 0, %s95
    %s112 = sphi 0, %s96
    %s120 = sphi 0, %s122
    %s123 = sphi 0, %s120
    %s124 = sphi 0, %s123
    %s140 = sphi 0, %s124
  $region4: #{_forward.3} parent=0 // loop_header_branch
    %19 = sbr.rel (%p17) target = $region8
  $region5: #{_forward.3} parent=0 // loop_body
    %s21 = ssub.s32 %s16, 1
    %s22 = ssub.s32 %s16, 2
    %s29 = sadd.s32 1, %s24
    %p30 = scmp.ge.s32.totalorder %s29, 1
    %s31 = scalar_select %p30, 0, %s29
    %s32 = sadd.s32 1, %s23
    %s33 = scalar_select %p30, %s32, %s23
    %p34 = scmp.ge.s32.totalorder %s33, 16
    %s35 = scalar_select %p34, 0, %s33
    %s36 = ssub.s32 %s23, %s35
    %s37 = ssub.s32 %s24, %s31
    %s38 = sor.u32 %s36, %s37
    %p39 = scmp.eq.s32.totalorder %s38, 0
    %s41 = sadd.s32 %s40, 1
    %s42 = scalar_select %p39, %s40, %s41
    %p45 = pneg %p39
    %p46 = scmp.eq.s32.totalorder %s16, 15
    %p47 = por %p45, %p46
    %p48 = scmp.ne.s32.totalorder %s40, %s43
    %p49 = scmp.eq.s32.totalorder %s16, 0
    %p50 = por %p48, %p49
    %p51 = scmp.ne.s32.totalorder %s40, %s43
    %p52 = scmp.eq.s32.totalorder %s21, 15
    %p53 = por %p51, %p52
    %p54 = scmp.ne.s32.totalorder %s43, %s44
    %p55 = scmp.eq.s32.totalorder %s21, 0
    %p56 = por %p54, %p55
    %p57 = scmp.ne.s32.totalorder %s43, %s44
    %p58 = scmp.eq.s32.totalorder %s22, 15
    %p59 = por %p57, %p58
    %p61 = scmp.ne.s32.totalorder %s44, %s60
    %p62 = scmp.eq.s32.totalorder %s22, 0
    %p63 = por %p61, %p62
    %s64 = ssub.s32 %s23, %s35
    %p65 = scmp.eq.s32.totalorder %s64, 0
    %s67 = sadd.s32 %s66, 1
    %s68 = scalar_select %p65, %s66, %s67
    %p71 = pneg %p65
    %p72 = scmp.eq.s32.totalorder %s16, 15
    %p73 = por %p71, %p72
    %p74 = scmp.ne.s32.totalorder %s66, %s69
    %p75 = scmp.eq.s32.totalorder %s16, 0
    %p76 = por %p74, %p75
    %p77 = scmp.ne.s32.totalorder %s66, %s69
    %p78 = scmp.eq.s32.totalorder %s21, 15
    %p79 = por %p77, %p78
    %p80 = scmp.ne.s32.totalorder %s69, %s70
    %p81 = scmp.eq.s32.totalorder %s21, 0
    %p82 = por %p80, %p81
    %p83 = scmp.ne.s32.totalorder %s69, %s70
    %p84 = scmp.eq.s32.totalorder %s22, 15
    %p85 = por %p83, %p84
    %p87 = scmp.ne.s32.totalorder %s70, %s86
    %p88 = scmp.eq.s32.totalorder %s22, 0
    %p89 = por %p87, %p88
    %s90 = ssub.s32 %s23, %s35
    %p91 = scmp.eq.s32.totalorder %s90, 0
    %s93 = sadd.s32 %s92, 1
    %s94 = scalar_select %p91, %s92, %s93
    %p97 = pneg %p91
    %p98 = scmp.eq.s32.totalorder %s16, 15
    %p99 = por %p97, %p98
    %p100 = scmp.ne.s32.totalorder %s92, %s95
    %p101 = scmp.eq.s32.totalorder %s16, 0
    %p102 = por %p100, %p101
    %p103 = scmp.ne.s32.totalorder %s92, %s95
    %p104 = scmp.eq.s32.totalorder %s21, 15
    %p105 = por %p103, %p104
    %p106 = scmp.ne.s32.totalorder %s95, %s96
    %p107 = scmp.eq.s32.totalorder %s21, 0
    %p108 = por %p106, %p107
    %p109 = scmp.ne.s32.totalorder %s95, %s96
    %p110 = scmp.eq.s32.totalorder %s22, 15
    %p111 = por %p109, %p110
    %p113 = scmp.ne.s32.totalorder %s96, %s112
    %p114 = scmp.eq.s32.totalorder %s22, 0
    %p115 = por %p113, %p114
    %s116 = ssub.s32 %s23, %s35
    %s117 = ssub.s32 %s24, %s31
    %s118 = sor.u32 %s116, %s117
    %p119 = scmp.eq.s32.totalorder %s118, 0
    %s121 = sadd.s32 %s120, 1
    %s122 = scalar_select %p119, %s120, %s121
    %p125 = pneg %p119
    %p126 = scmp.eq.s32.totalorder %s16, 15
    %p127 = por %p125, %p126
    %p128 = scmp.ne.s32.totalorder %s120, %s123
    %p129 = scmp.eq.s32.totalorder %s16, 0
    %p130 = por %p128, %p129
    %p131 = scmp.ne.s32.totalorder %s120, %s123
    %p132 = scmp.eq.s32.totalorder %s21, 15
    %p133 = por %p131, %p132
    %p134 = scmp.ne.s32.totalorder %s123, %s124
    %p135 = scmp.eq.s32.totalorder %s21, 0
    %p136 = por %p134, %p135
    %p137 = scmp.ne.s32.totalorder %s123, %s124
    %p138 = scmp.eq.s32.totalorder %s22, 15
    %p139 = por %p137, %p138
    %p141 = scmp.ne.s32.totalorder %s124, %s140
    %p142 = scmp.eq.s32.totalorder %s22, 0
    %p143 = por %p141, %p142
    %p144 = scmp.le.s32.totalorder 1, %s16
    %p145 = scmp.lt.s32.totalorder %s16, 17
    %p146 = pnand %p144, %p145
    %p147 = pneg %p146
    // Predicated region
    $region9: #{_forward.3} parent=5 // pred_check
      _
    $region10: #{_forward.3} parent=5 // pred_check_branch
      %149 = sbr.rel (%p146) target = $region12
    $region11: #{_forward.3} parent=5 // pred_region
      %s150 = ssub.s32 %s16, 1
    $region12: #{_forward.3} parent=5 // pred_fallthru
      _
    %p151 = scmp.lt.s32.totalorder %s16, 16
    // Predicated region
    $region13: #{_forward.3} parent=5 // pred_check
      %p152 = pneg %p151
    $region14: #{_forward.3} parent=5 // pred_check_branch
      %154 = sbr.rel (%p152) target = $region16
    $region15: #{_forward.3} parent=5 // pred_region
      // Predicated region
      $region17: #{_forward.3} parent=15 // pred_check
        %p155 = pneg %p50
      $region18: #{_forward.3} parent=15 // pred_check_branch
        %157 = sbr.rel (%p155) target = $region20
      $region19: #{_forward.3} parent=15 // pred_region
        %s158 = smul.u32 2, %s24
        %p159 = scmp.lt.s32.totalorder %s23, 15
        %s160 = scalar_select %p159, %s23, 15
        %p161 = scmp.lt.s32.totalorder %s158, 1
        %s162 = scalar_select %p161, %s158, 1
        %s163 = smul.addr %s160, 2
        %s164 = sadd.s32 %s162, %s163
        %s165 = smul.addr %s164, 4
        %s166 = scalar_lea.vmem %s1, %s165
        %s167 = smul.u32 2, %s24
      $region20: #{_forward.3} parent=15 // pred_fallthru
        _
      // Predicated region
      $region21: #{_forward.3} parent=15 // pred_check
        %p168 = pneg %p76
      $region22: #{_forward.3} parent=15 // pred_check_branch
        %170 = sbr.rel (%p168) target = $region24
      $region23: #{_forward.3} parent=15 // pred_region
        %p171 = scmp.lt.s32.totalorder %s23, 15
        %s172 = scalar_select %p171, %s23, 15
        %s173 = smul.addr %s172, 16
        %s174 = smul.addr %s173, 4
        %s175 = scalar_lea.vmem %s2, %s174
      $region24: #{_forward.3} parent=15 // pred_fallthru
        _
      // Predicated region
      $region25: #{_forward.3} parent=15 // pred_check
        %p176 = pneg %p102
      $region26: #{_forward.3} parent=15 // pred_check_branch
        %178 = sbr.rel (%p176) target = $region28
      $region27: #{_forward.3} parent=15 // pred_region
        %p179 = scmp.lt.s32.totalorder %s23, 15
        %s180 = scalar_select %p179, %s23, 15
        %s181 = smul.addr %s180, 16
        %s182 = smul.addr %s181, 4
        %s183 = scalar_lea.vmem %s3, %s182
      $region28: #{_forward.3} parent=15 // pred_fallthru
        _
    $region16: #{_forward.3} parent=5 // pred_fallthru
      _
    %p184 = scmp.le.s32.totalorder 1, %s16
    %p185 = scmp.lt.s32.totalorder %s16, 17
    %p186 = pnand %p184, %p185
    %p187 = pneg %p186
    // Predicated region
    $region29: #{_forward.3} parent=5 // pred_check
      _
    $region30: #{_forward.3} parent=5 // pred_check_branch
      %189 = sbr.rel (%p186) target = $region32
    $region31: #{_forward.3} parent=5 // pred_region
      %s190 = ssub.s32 %s16, 1
      %s191 = smul.u32 2, %s26
      %p192 = scmp.lt.s32.totalorder %s25, 15
      %s193 = scalar_select %p192, %s25, 15
      %p194 = scmp.lt.s32.totalorder %s191, 1
      %s195 = scalar_select %p194, %s191, 1
      %s196 = smul.addr %s193, 2
      %s197 = sadd.s32 %s195, %s196
      %s198 = smul.addr %s197, 4
      %s199 = scalar_lea.vmem %s1, %s198
      %p200 = pneg %p56
      %p201 = pneg %p53
      %p202 = scmp.lt.s32.totalorder %s25, 15
      %s203 = scalar_select %p202, %s25, 15
      %s204 = smul.addr %s203, 16
      %s205 = smul.addr %s204, 4
      %s206 = scalar_lea.vmem %s2, %s205
      %p207 = pneg %p82
      %p208 = pneg %p79
      %p209 = scmp.lt.s32.totalorder %s25, 15
      %s210 = scalar_select %p209, %s25, 15
      %s211 = smul.addr %s210, 16
      %s212 = smul.addr %s211, 4
      %s213 = scalar_lea.vmem %s3, %s212
      %p214 = pneg %p108
      %p215 = pneg %p105
      %p216 = pneg %p136
      %p217 = pneg %p133
      %s218 = smul.u32 2, %s26
      %p219 = scmp.lt.s32.totalorder %s25, 15
      %s220 = scalar_select %p219, %s25, 15
      %p221 = scmp.lt.s32.totalorder %s218, 1
      %s222 = scalar_select %p221, %s218, 1
      %s223 = smul.addr %s220, 2
      %s224 = sadd.s32 %s222, %s223
      %s225 = smul.addr %s224, 8
      %s226 = scalar_lea.vmem %s4, %s225
      %s227 = smul.u32 2, %s26
      %p228 = scmp.lt.s32.totalorder %s25, 15
      %s229 = scalar_select %p228, %s25, 15
      %p230 = scmp.lt.s32.totalorder %s227, 1
      %s231 = scalar_select %p230, %s227, 1
      %s232 = smul.addr %s229, 2
      %s233 = sadd.s32 %s231, %s232
      %s234 = smul.addr %s233, 4
      %s235 = scalar_lea.vmem %s1, %s234
      %s236 = smul.u32 2, %s26
      %p237 = scmp.lt.s32.totalorder %s25, 15
      %s238 = scalar_select %p237, %s25, 15
      %s239 = smul.addr %s238, 16
      %s240 = smul.addr %s239, 4
      %s241 = scalar_lea.vmem %s2, %s240
      %p242 = scmp.lt.s32.totalorder %s25, 15
      %s243 = scalar_select %p242, %s25, 15
      %s244 = smul.addr %s243, 16
      %s245 = smul.addr %s244, 4
      %s246 = scalar_lea.vmem %s3, %s245
      %s247 = smul.u32 2, %s26
      %p248 = scmp.lt.s32.totalorder %s25, 15
      %s249 = scalar_select %p248, %s25, 15
      %p250 = scmp.lt.s32.totalorder %s247, 1
      %s251 = scalar_select %p250, %s247, 1
      %s252 = smul.addr %s249, 2
      %s253 = sadd.s32 %s251, %s252
      %s254 = smul.addr %s253, 8
      %s255 = scalar_lea.vmem %s4, %s254
      %s256 = smul.u32 2, %s26
      %s258 = sld [smem:[#allocation3 + %s25]]
      %p259 = scmp.gt.s32.totalorder %s258, 0
      // Predicated region
      $region33: #{_forward.3} parent=31 // pred_check
        %p260 = pneg %p259
      $region34: #{_forward.3} parent=31 // pred_check_branch
        %262 = sbr.rel (%p260) target = $region36
      $region35: #{_forward.3} parent=31 // pred_region
        %v263 = vld [vmem:[%s235] sm:$0xf]
        %v264 = vld [vmem:[%s235 + $0x4] sm:$0xf]
        %v265 = vld [vmem:[%s241] sm:$0xf]
        %v266 = vld [vmem:[%s241 + $0x4] sm:$0xf]
        %v267 = vld [vmem:[%s241 + $0x8] sm:$0xf]
        %v268 = vld [vmem:[%s241 + $0xc] sm:$0xf]
        %v269 = vld [vmem:[%s241 + $0x10] sm:$0xf]
        %v270 = vld [vmem:[%s241 + $0x14] sm:$0xf]
        %v271 = vld [vmem:[%s241 + $0x18] sm:$0xf]
        %v272 = vld [vmem:[%s241 + $0x1c] sm:$0xf]
        %v273 = vld [vmem:[%s241 + $0x20] sm:$0xf]
        %v274 = vld [vmem:[%s241 + $0x24] sm:$0xf]
        %v275 = vld [vmem:[%s241 + $0x28] sm:$0xf]
        %v276 = vld [vmem:[%s241 + $0x2c] sm:$0xf]
        %v277 = vld [vmem:[%s241 + $0x30] sm:$0xf]
        %v278 = vld [vmem:[%s241 + $0x34] sm:$0xf]
        %v279 = vld [vmem:[%s241 + $0x38] sm:$0xf]
        %v280 = vld [vmem:[%s241 + $0x3c] sm:$0xf]
        %v283 = vunpack.c.l.b16 %v263
        %v284 = vunpack.c.l.b16 %v264
        %v285 = vpack.c.b16 %v284, %v283
        %v303 = vunpack.c.l.b16 %v265
        %v304 = vunpack.c.l.b16 %v266
        %v305 = vunpack.c.l.b16 %v267
        %v306 = vunpack.c.l.b16 %v268
        %v307 = vunpack.c.l.b16 %v269
        %v308 = vunpack.c.l.b16 %v270
        %v309 = vunpack.c.l.b16 %v271
        %v310 = vunpack.c.l.b16 %v272
        %v311 = vunpack.c.l.b16 %v273
        %v312 = vunpack.c.l.b16 %v274
        %v313 = vunpack.c.l.b16 %v275
        %v314 = vunpack.c.l.b16 %v276
        %v315 = vunpack.c.l.b16 %v277
        %v316 = vunpack.c.l.b16 %v278
        %v317 = vunpack.c.l.b16 %v279
        %v318 = vunpack.c.l.b16 %v280
        %v319 = vpack.c.b16 %v304, %v303
        %v320 = vpack.c.b16 %v306, %v305
        %v321 = vpack.c.b16 %v308, %v307
        %v322 = vpack.c.b16 %v310, %v309
        %v323 = vpack.c.b16 %v312, %v311
        %v324 = vpack.c.b16 %v314, %v313
        %v325 = vpack.c.b16 %v316, %v315
        %v326 = vpack.c.b16 %v318, %v317
        %335 = vmatprep.subr.bf16.mxu0 0
        %336 = vmatpush1.bf16.msra.mxu0 %v326
        %337 = vmatprep.subr.bf16.mxu0 0
        %338 = vmatpush1.bf16.msra.mxu0 %v325
        %339 = vmatprep.subr.bf16.mxu0 0
        %340 = vmatpush1.bf16.msra.mxu0 %v324
        %341 = vmatprep.subr.bf16.mxu0 0
        %342 = vmatpush1.bf16.msra.mxu0 %v323
        %343 = vmatprep.subr.bf16.mxu0 0
        %344 = vmatpush1.bf16.msra.mxu0 %v322
        %345 = vmatprep.subr.bf16.mxu0 0
        %346 = vmatpush1.bf16.msra.mxu0 %v321
        %347 = vmatprep.subr.bf16.mxu0 0
        %348 = vmatpush1.bf16.msra.mxu0 %v320
        %349 = vmatprep.subr.bf16.mxu0 0
        %350 = vmatpush1.bf16.msra.mxu0 %v319
        %351 = vmatprep.subr.bf16.mxu0 0
        %352 = vmatpush2.bf16.msra.mxu0 0
        %353 = vmatprep.subr.bf16.mxu0 0
        %354 = vmatpush2.bf16.msra.mxu0 0
        %355 = vmatprep.subr.bf16.mxu0 0
        %356 = vmatpush2.bf16.msra.mxu0 0
        %357 = vmatprep.subr.bf16.mxu0 0
        %358 = vmatpush2.bf16.msra.mxu0 0
        %359 = vmatprep.subr.bf16.mxu0 0
        %360 = vmatpush2.bf16.msra.mxu0 0
        %361 = vmatprep.subr.bf16.mxu0 0
        %362 = vmatpush2.bf16.msra.mxu0 0
        %363 = vmatprep.subr.bf16.mxu0 0
        %364 = vmatpush2.bf16.msra.mxu0 0
        %365 = vmatprep.subr.bf16.mxu0 0
        %366 = vmatpush2.bf16.msra.mxu0 0
        %367 = vmatprep.mubr.bf16.mxu0 0
        %368 = vmatmul.mubr.bf16.gmra.mxu0 %v285
        %v369 = vpop.f32.mrf.mxu0
        %v370 = vadd.f32 0.0, %v369
        %v371 = vpop.f32.mrf.mxu0
        %v372 = vpop.f32.mrf.mxu0
        %v373 = vadd.f32 0.0, %v372
        %v374 = vpop.f32.mrf.mxu0
        %375 = vdwg.mxu0
        %v376 = vmax.f32 %v370, 0.0
        %v377 = vmax.f32 %v373, 0.0
        %v378 = vpack.c.bf16 %v377, %v376
        %v379 = vld [vmem:[%s246] sm:$0xf]
        %v380 = vld [vmem:[%s246 + $0x4] sm:$0xf]
        %v381 = vld [vmem:[%s246 + $0x8] sm:$0xf]
        %v382 = vld [vmem:[%s246 + $0xc] sm:$0xf]
        %v383 = vld [vmem:[%s246 + $0x10] sm:$0xf]
        %v384 = vld [vmem:[%s246 + $0x14] sm:$0xf]
        %v385 = vld [vmem:[%s246 + $0x18] sm:$0xf]
        %v386 = vld [vmem:[%s246 + $0x1c] sm:$0xf]
        %v387 = vld [vmem:[%s246 + $0x20] sm:$0xf]
        %v388 = vld [vmem:[%s246 + $0x24] sm:$0xf]
        %v389 = vld [vmem:[%s246 + $0x28] sm:$0xf]
        %v390 = vld [vmem:[%s246 + $0x2c] sm:$0xf]
        %v391 = vld [vmem:[%s246 + $0x30] sm:$0xf]
        %v392 = vld [vmem:[%s246 + $0x34] sm:$0xf]
        %v393 = vld [vmem:[%s246 + $0x38] sm:$0xf]
        %v394 = vld [vmem:[%s246 + $0x3c] sm:$0xf]
        %v411 = vunpack.c.l.b16 %v379
        %v412 = vunpack.c.l.b16 %v380
        %v413 = vunpack.c.l.b16 %v381
        %v414 = vunpack.c.l.b16 %v382
        %v415 = vunpack.c.l.b16 %v383
        %v416 = vunpack.c.l.b16 %v384
        %v417 = vunpack.c.l.b16 %v385
        %v418 = vunpack.c.l.b16 %v386
        %v419 = vunpack.c.l.b16 %v387
        %v420 = vunpack.c.l.b16 %v388
        %v421 = vunpack.c.l.b16 %v389
        %v422 = vunpack.c.l.b16 %v390
        %v423 = vunpack.c.l.b16 %v391
        %v424 = vunpack.c.l.b16 %v392
        %v425 = vunpack.c.l.b16 %v393
        %v426 = vunpack.c.l.b16 %v394
        %v427 = vpack.c.b16 %v412, %v411
        %v428 = vpack.c.b16 %v414, %v413
        %v429 = vpack.c.b16 %v416, %v415
        %v430 = vpack.c.b16 %v418, %v417
        %v431 = vpack.c.b16 %v420, %v419
        %v432 = vpack.c.b16 %v422, %v421
        %v433 = vpack.c.b16 %v424, %v423
        %v434 = vpack.c.b16 %v426, %v425
        %443 = vmatprep.subr.bf16.mxu0 0
        %444 = vmatpush1.bf16.msra.mxu0 %v434
        %445 = vmatprep.subr.bf16.mxu0 0
        %446 = vmatpush1.bf16.msra.mxu0 %v433
        %447 = vmatprep.subr.bf16.mxu0 0
        %448 = vmatpush1.bf16.msra.mxu0 %v432
        %449 = vmatprep.subr.bf16.mxu0 0
        %450 = vmatpush1.bf16.msra.mxu0 %v431
        %451 = vmatprep.subr.bf16.mxu0 0
        %452 = vmatpush1.bf16.msra.mxu0 %v430
        %453 = vmatprep.subr.bf16.mxu0 0
        %454 = vmatpush1.bf16.msra.mxu0 %v429
        %455 = vmatprep.subr.bf16.mxu0 0
        %456 = vmatpush1.bf16.msra.mxu0 %v428
        %457 = vmatprep.subr.bf16.mxu0 0
        %458 = vmatpush1.bf16.msra.mxu0 %v427
        %459 = vmatprep.subr.bf16.mxu0 0
        %460 = vmatpush2.bf16.msra.mxu0 0
        %461 = vmatprep.subr.bf16.mxu0 0
        %462 = vmatpush2.bf16.msra.mxu0 0
        %463 = vmatprep.subr.bf16.mxu0 0
        %464 = vmatpush2.bf16.msra.mxu0 0
        %465 = vmatprep.subr.bf16.mxu0 0
        %466 = vmatpush2.bf16.msra.mxu0 0
        %467 = vmatprep.subr.bf16.mxu0 0
        %468 = vmatpush2.bf16.msra.mxu0 0
        %469 = vmatprep.subr.bf16.mxu0 0
        %470 = vmatpush2.bf16.msra.mxu0 0
        %471 = vmatprep.subr.bf16.mxu0 0
        %472 = vmatpush2.bf16.msra.mxu0 0
        %473 = vmatprep.subr.bf16.mxu0 0
        %474 = vmatpush2.bf16.msra.mxu0 0
        %475 = vmatprep.mubr.bf16.mxu0 0
        %476 = vmatmul.mubr.bf16.gmra.mxu0 %v378
        %v477 = vpop.f32.mrf.mxu0
        %v478 = vadd.f32 0.0, %v477
        %v479 = vpop.f32.mrf.mxu0
        %v480 = vpop.f32.mrf.mxu0
        %v481 = vadd.f32 0.0, %v480
        %v482 = vpop.f32.mrf.mxu0
        %483 = vdwg.mxu0
        %484 = vst [vmem:[%s255] sm:$0xff] %v478
        %485 = vst [vmem:[%s255 + $0x8] sm:$0xff] %v481
      $region36: #{_forward.3} parent=31 // pred_fallthru
        _
      %p486 = scmp.eq.s32.totalorder %s258, 0
      // Predicated region
      $region37: #{_forward.3} parent=31 // pred_check
        %p487 = pneg %p486
      $region38: #{_forward.3} parent=31 // pred_check_branch
        %489 = sbr.rel (%p487) target = $region40
      $region39: #{_forward.3} parent=31 // pred_region
        %490 = vst [vmem:[%s255] sm:$0xff] 0.0
        %491 = vst [vmem:[%s255 + $0x8] sm:$0xff] 0.0
      $region40: #{_forward.3} parent=31 // pred_fallthru
        _
      %s492 = smul.u32 2, %s26
      %p493 = scmp.lt.s32.totalorder %s25, 15
      %s494 = scalar_select %p493, %s25, 15
      %p495 = scmp.lt.s32.totalorder %s492, 1
      %s496 = scalar_select %p495, %s492, 1
      %s497 = smul.addr %s494, 2
      %s498 = sadd.s32 %s496, %s497
      %s499 = smul.addr %s498, 8
      %s500 = scalar_lea.vmem %s4, %s499
      // Predicated region
      $region41: #{_forward.3} parent=31 // pred_check
        %p501 = pneg %p133
      $region42: #{_forward.3} parent=31 // pred_check_branch
        %503 = sbr.rel (%p501) target = $region44
      $region43: #{_forward.3} parent=31 // pred_region
        %s504 = smul.u32 2, %s26
      $region44: #{_forward.3} parent=31 // pred_fallthru
        _
    $region32: #{_forward.3} parent=5 // pred_fallthru
      _
    %p505 = scmp.le.s32.totalorder 2, %s16
    // Predicated region
    $region45: #{_forward.3} parent=5 // pred_check
      %p506 = pneg %p505
    $region46: #{_forward.3} parent=5 // pred_check_branch
      %508 = sbr.rel (%p506) target = $region48
    $region47: #{_forward.3} parent=5 // pred_region
      %s509 = ssub.s32 %s16, 2
      // Predicated region
      $region49: #{_forward.3} parent=47 // pred_check
        %p510 = pneg %p139
      $region50: #{_forward.3} parent=47 // pred_check_branch
        %512 = sbr.rel (%p510) target = $region52
      $region51: #{_forward.3} parent=47 // pred_region
        %s513 = smul.u32 2, %s28
        %p514 = scmp.lt.s32.totalorder %s27, 15
        %s515 = scalar_select %p514, %s27, 15
        %p516 = scmp.lt.s32.totalorder %s513, 1
        %s517 = scalar_select %p516, %s513, 1
        %s518 = smul.addr %s515, 2
        %s519 = sadd.s32 %s517, %s518
        %s520 = smul.addr %s519, 8
        %s521 = scalar_lea.vmem %s4, %s520
      $region52: #{_forward.3} parent=47 // pred_fallthru
        _
    $region48: #{_forward.3} parent=5 // pred_fallthru
      _
  $region6: #{_forward.3} parent=0 // loop_footer
    %s20 = sadd.s32 1, %s16
  $region7: #{_forward.3} parent=0 // loop_footer_branch
    %15 = sbr.rel target = $region3
  $region8: #{_forward.3} parent=0 // loop_exit
    _

</llo_original>
